<compile_context>
chip_gen: v5e
topology: v5e:2x2
jax: 0.10.0
libtpu: 0.0.40
codegen_flags: <defaults>
</compile_context>

<pallas_src>
import functools
import math

import jax
import jax.numpy as jnp
from jax.experimental import pallas as pl
from jax.experimental.pallas import tpu as pltpu


def _round_up(x, m):
    return ((x + m - 1) // m) * m


def _cdiv(a, b):
    return (a + b - 1) // b


def _col_tiling(n, max_tk=1024, step_cost_cols=256):
    """Pick (tk, n_k): tk a multiple of 128 with tk <= max_tk, n_k = c*tk >= n.

    Minimizes streamed adjacency columns (HBM bytes on the dominant tensor)
    plus a per-grid-step overhead term (~0.35us/step is worth a few hundred
    columns of DMA), instead of blindly rounding N up to a multiple of tk.
    """
    n_k128 = _round_up(n, 128)
    if n_k128 <= max_tk:
        return n_k128, n_k128          # single K tile, minimal padding
    best = None
    for c in range(_cdiv(n, max_tk), n_k128 // 128 + 1):
        tk = _round_up(_cdiv(n, c), 128)
        if tk > max_tk:
            continue
        n_k = c * tk
        cost = n_k + c * step_cost_cols
        if best is None or cost < best[0]:
            best = (cost, tk, n_k)
    _, tk, n_k = best
    return tk, n_k


def _row_tiling(n, target_tm=512):
    """Pick (tm, n_m): tm a multiple of 16 (bf16 sublane packing), at most 15
    padded rows per tile, and >=2 row tiles when N >= 32 (v7x megacore)."""
    r = max(_cdiv(n, target_tm), 2 if n >= 32 else 1)
    tm = _round_up(_cdiv(n, r), 16)
    return tm, r * tm


def prepare_adjacency(adj, n_m, n_k):
    """Cast the dense adjacency to bf16 and pad to (n_m, n_k).

    Do this ONCE per graph and reuse the result across GCN layers / steps:
    repeating it costs an extra full HBM pass over adj. No-op if adj already
    matches; cast-before-pad so the padded region is written only once."""
    n_r, n_c = adj.shape
    if adj.dtype == jnp.bfloat16 and (n_r, n_c) == (n_m, n_k):
        return adj
    out = adj.astype(jnp.bfloat16)
    if (n_r, n_c) != (n_m, n_k):
        out = jnp.pad(out, ((0, n_m - n_r), (0, n_k - n_c)))
    return out


# --------------------------- kernels ----------------------------------------


def _support_kernel(x_ref, w_ref, s_ref):
    # support tile = X_tile @ W, computed exactly once per row tile.
    s_ref[...] = jnp.dot(
        x_ref[...], w_ref[...], preferred_element_type=jnp.float32
    ).astype(s_ref.dtype)


def _agg_kernel_resident(adj_ref, sup_ref, b_ref, o_ref, *, tk):
    # support is fully resident in VMEM (constant index_map -> DMA'd once);
    # accumulate directly into the resident f32 output block.
    k = pl.program_id(1)

    @pl.when(k == 0)
    def _():
        o_ref[...] = jnp.zeros_like(o_ref)

    start = pl.multiple_of(k * tk, 128)
    o_ref[...] += jnp.dot(
        adj_ref[...], sup_ref[pl.ds(start, tk), :],
        preferred_element_type=jnp.float32,
    )

    @pl.when(k == pl.num_programs(1) - 1)
    def _():
        o_ref[...] += b_ref[...]


def _agg_kernel_streamed(adj_ref, sup_ref, b_ref, o_ref):
    # support streamed per K tile (large support case).
    k = pl.program_id(1)

    @pl.when(k == 0)
    def _():
        o_ref[...] = jnp.zeros_like(o_ref)

    o_ref[...] += jnp.dot(
        adj_ref[...], sup_ref[...], preferred_element_type=jnp.float32
    )

    @pl.when(k == pl.num_programs(1) - 1)
    def _():
        o_ref[...] += b_ref[...]


# --------------------------- wrapper -----------------------------------------


def graph_convolution(input_features, adj, weight, bias=None, *,
                      support_resident_bytes=8 << 20):
    """GCN layer forward. input_features: [N, F_in], adj: [N, N] dense (f32 or
    already-prepared bf16 padded), weight: [F_in, F_out], bias: [F_out] or
    None. Returns [N, F_out] f32."""
    n, f_in = input_features.shape
    f_out = weight.shape[1]

    # ---- tile sizing --------------------------------------------------------
    fp = _round_up(f_out, 128)                       # lane-dense output cols
    if fp <= 1024:
        max_tk, target_tm = 1024, 512
    else:                                            # huge F_out: keep VMEM sane
        max_tk, target_tm = 512, 256

    tk, n_k = _col_tiling(n, max_tk=max_tk)

    # Hold the whole support in VMEM when it fits a conservative budget
    # (counting double-buffering); otherwise stream it per K tile.
    sup_vmem = 2 * n_k * fp * 2
    resident = sup_vmem <= support_resident_bytes
    if not resident:
        target_tm = max(target_tm, 512)              # halve support re-streaming

    tm, n_m = _row_tiling(n, target_tm=target_tm)

    # ---- adjacency: pad + cast once (reusable across layers) ----------------
    adj_p = prepare_adjacency(adj, n_m, n_k)

    # ---- pass 1: support = X @ W  (bf16 in, f32 MXU accumulate, bf16 out) ---
    x_p = jnp.pad(input_features, ((0, n_k - n), (0, 0))).astype(jnp.bfloat16)
    w_p = jnp.pad(weight, ((0, 0), (0, fp - f_out))).astype(jnp.bfloat16)

    support = pl.pallas_call(
        _support_kernel,
        out_shape=jax.ShapeDtypeStruct((n_k, fp), jnp.bfloat16),
        grid_spec=pltpu.PrefetchScalarGridSpec(
            num_scalar_prefetch=0,
            grid=(n_k // tk,),
            in_specs=[
                pl.BlockSpec((tk, f_in), lambda i: (i, 0)),
                pl.BlockSpec((f_in, fp), lambda i: (0, 0)),
            ],
            out_specs=pl.BlockSpec((tk, fp), lambda i: (i, 0)),
        ),
        compiler_params=pltpu.CompilerParams(
            dimension_semantics=("parallel",)
        ),
    )(x_p, w_p)

    if bias is None:
        bias_p = jnp.zeros((1, fp), dtype=jnp.float32)
    else:
        bias_p = jnp.pad(
            bias.reshape(1, f_out).astype(jnp.float32),
            ((0, 0), (0, fp - f_out)),
        )

    # ---- pass 2: out = adj @ support + bias  (tiled K-reduction) ------------
    if resident:
        kernel = functools.partial(_agg_kernel_resident, tk=tk)
        sup_spec = pl.BlockSpec((n_k, fp), lambda i, k: (0, 0))
        sup_bytes = sup_vmem
    else:
        kernel = _agg_kernel_streamed
        sup_spec = pl.BlockSpec((tk, fp), lambda i, k: (k, 0))
        sup_bytes = 2 * tk * fp * 2

    vmem_est = (2 * tm * tk * 2        # adj tiles   (bf16, double-buffered)
                + sup_bytes            # support     (resident or per-K tile)
                + 2 * tm * fp * 4      # output tile (f32, double-buffered)
                + 2 * fp * 4           # bias
                + (2 << 20))           # headroom
    vmem_limit = int(min(max(vmem_est, 16 << 20), 64 << 20))

    out_p = pl.pallas_call(
        kernel,
        out_shape=jax.ShapeDtypeStruct((n_m, fp), jnp.float32),
        grid_spec=pltpu.PrefetchScalarGridSpec(
            num_scalar_prefetch=0,
            grid=(n_m // tm, n_k // tk),
            in_specs=[
                pl.BlockSpec((tm, tk), lambda i, k: (i, k)),   # adj tile
                sup_spec,                                      # support
                pl.BlockSpec((1, fp), lambda i, k: (0, 0)),    # bias
            ],
            out_specs=pl.BlockSpec((tm, fp), lambda i, k: (i, 0)),
        ),
        compiler_params=pltpu.CompilerParams(
            dimension_semantics=("parallel", "arbitrary"),
            vmem_limit_bytes=vmem_limit,
        ),
    )(adj_p, support, bias_p)

    return out_p[:n, :f_out]


if __name__ == "__main__":
    # Small shapes consistent with the module: N nodes, in/out feature dims.
    N, F_IN, F_OUT = 16, 8, 32

    key = jax.random.PRNGKey(0)
    k_x, k_adj, k_w, k_b = jax.random.split(key, 4)

    # Deterministic parameter init mirroring reset_parameters():
    # uniform(-stdv, stdv), stdv = 1/sqrt(out_features).
    stdv = 1.0 / math.sqrt(F_OUT)
    weight = jax.random.uniform(
        k_w, (F_IN, F_OUT), minval=-stdv, maxval=stdv, dtype=jnp.float32
    )
    bias = jax.random.uniform(
        k_b, (F_OUT,), minval=-stdv, maxval=stdv, dtype=jnp.float32
    )

    # Example inputs: node features and a (dense) row-normalized adjacency.
    x = jax.random.normal(k_x, (N, F_IN), dtype=jnp.float32)
    adj_raw = (jax.random.uniform(k_adj, (N, N)) < 0.3).astype(jnp.float32)
    adj = adj_raw + jnp.eye(N, dtype=jnp.float32)  # add self-loops
    deg = jnp.sum(adj, axis=1, keepdims=True)
    adj = adj / deg  # row-normalize

    out = graph_convolution(x, adj, weight, bias)
    jax.block_until_ready(out)

    # Reference check in plain JAX (same math, full f32).
    ref = adj @ (x @ weight) + bias[None, :]
    assert out.shape == (N, F_OUT)
    # Tolerance accounts for bf16 X/W/adj/support fed to the MXU
    # (accumulation stays f32); observed error is well under 1%.
    assert jnp.allclose(out, ref, atol=2e-2, rtol=2e-2)

    print("KERNEL_OK")
</pallas_src>

<mosaic_0001>
module attributes {stable_mosaic.version = 11 : i64} {
  func.func @_support_kernel(%arg0: i32, %arg1: memref<128x8xbf16, #tpu.memory_space<vmem>>, %arg2: memref<8x128xbf16, #tpu.memory_space<vmem>>, %arg3: memref<128x128xbf16, #tpu.memory_space<vmem>>) attributes {dimension_semantics = [#tpu.dimension_semantics<parallel>], iteration_bounds = array<i64: 1>, scalar_prefetch = 0 : i64, scratch_operands = 0 : i64, tpu.core_type = #tpu.core_type<tc>, window_params = [{transform_indices = @transform_0, window_bounds = array<i64: 128, 8>}, {pipeline_mode = #tpu.pipeline_mode<synchronous>, transform_indices = @transform_1, window_bounds = array<i64: 8, 128>}, {transform_indices = @transform_2, window_bounds = array<i64: 128, 128>}]} {
    %c0 = arith.constant 0 : index
    %c0_0 = arith.constant 0 : index
    %0 = vector.load %arg1[%c0, %c0_0] : memref<128x8xbf16, #tpu.memory_space<vmem>>, vector<128x8xbf16>
    %c0_1 = arith.constant 0 : index
    %c0_2 = arith.constant 0 : index
    %1 = vector.load %arg2[%c0_1, %c0_2] : memref<8x128xbf16, #tpu.memory_space<vmem>>, vector<8x128xbf16>
    %cst = arith.constant dense<0.000000e+00> : vector<128x128xf32>
    %2 = tpu.matmul %0, %1, %cst {dimension_numbers = #tpu.dot_dimension_numbers<[1], [0], [0], [1], [0, 0, 1, 1], [], []>} : vector<128x8xbf16>, vector<8x128xbf16>, vector<128x128xf32> -> vector<128x128xf32>
    %3 = arith.truncf %2 : vector<128x128xf32> to vector<128x128xbf16>
    %c0_3 = arith.constant 0 : index
    %c0_4 = arith.constant 0 : index
    %4 = vector.load %arg3[%c0_3, %c0_4] : memref<128x128xbf16, #tpu.memory_space<vmem>>, vector<128x128xbf16>
    tpu.vector_store %arg3[%c0_3, %c0_4], %3 {strides = array<i32>} : memref<128x128xbf16, #tpu.memory_space<vmem>>, vector<128x128xbf16>,
    return
  }
  func.func @transform_0(%arg0: i32) -> (i32, i32) {
    %c0_i32 = arith.constant 0 : i32
    %c0_i32_0 = arith.constant 0 : i32
    return %arg0, %c0_i32 : i32, i32
  }
  func.func @transform_1(%arg0: i32) -> (i32, i32) {
    %c0_i32 = arith.constant 0 : i32
    %c0_i32_0 = arith.constant 0 : i32
    %c0_i32_1 = arith.constant 0 : i32
    return %c0_i32, %c0_i32_0 : i32, i32
  }
  func.func @transform_2(%arg0: i32) -> (i32, i32) {
    %c0_i32 = arith.constant 0 : i32
    %c0_i32_0 = arith.constant 0 : i32
    return %arg0, %c0_i32 : i32, i32
  }
}

</mosaic_0001>

<llo_original>
// kernel: tpu_custom_call.1
$region0: #{tpu_custom_call.1}
  #allocation0 [shape = 'u32[]', space=smem, size = 0x4, offset = 0x4, fixed_abs, tag = 'smem constant byte address 0x4 - core index']
  #allocation1 [shape = 'u32[72,128]{1,0:T(1,128)}', space=vmem, size = 0x9000, scoped, tag = 'internal scratch']
  %s0 = inlined_call_operand.vmem [shape: bf16[128,8], index: 0, kind: input, shape index: {}]
  %s1 = inlined_call_operand.vmem [shape: bf16[8,128], index: 1, kind: input, shape index: {}]
  %s2 = inlined_call_operand.hbm [shape: bf16[128,128], index: 2, kind: output, shape index: {}]
  %s3 = sld [smem:[#allocation0]]
  $region18: #{tpu_custom_call.1} parent=0
    _
  %s5 = ssub.s32 1, %s3
  %s6 = scalar_select 0, %s5, %s3
  $region1: #{tpu_custom_call.1} parent=0
    #allocation2 [shape = 'u8[32768]{0}', space=vmem, size = 0x8000, scoped, tag = 'output window, operand 0, single buffered']
    #allocation3 [shape = 's32[1]{0}', space=sflag, size = 0x4, scoped, tag = 'scoped memory for tpu_custom_call.1']
    %7 = vsyncpa [#allocation3], 0
    // Predicated region
    $region2: #{tpu_custom_call.1} parent=1 // pred_check
      _
    $region3: #{tpu_custom_call.1} parent=1 // pred_check_branch
      %9 = sbr.rel (0) target = $region5
    $region4: #{tpu_custom_call.1} parent=1 // pred_region
      _
    $region5: #{tpu_custom_call.1} parent=1 // pred_fallthru
      _
    // Predicated region
    $region6: #{tpu_custom_call.1} parent=1 // pred_check
      _
    $region7: #{tpu_custom_call.1} parent=1 // pred_check_branch
      %11 = sbr.rel (0) target = $region9
    $region8: #{tpu_custom_call.1} parent=1 // pred_region
      _
    $region9: #{tpu_custom_call.1} parent=1 // pred_fallthru
      _
    %v13 = vld [vmem:[%s0] sm:$0xf]
    %v14 = vld [vmem:[%s0 + $0x4] sm:$0xf]
    %v15 = vld [vmem:[%s0 + $0x8] sm:$0xf]
    %v16 = vld [vmem:[%s0 + $0xc] sm:$0xf]
    %v17 = vld [vmem:[%s0 + $0x10] sm:$0xf]
    %v18 = vld [vmem:[%s0 + $0x14] sm:$0xf]
    %v19 = vld [vmem:[%s0 + $0x18] sm:$0xf]
    %v20 = vld [vmem:[%s0 + $0x1c] sm:$0xf]
    %v21 = vld [vmem:[%s0 + $0x20] sm:$0xf]
    %v22 = vld [vmem:[%s0 + $0x24] sm:$0xf]
    %v23 = vld [vmem:[%s0 + $0x28] sm:$0xf]
    %v24 = vld [vmem:[%s0 + $0x2c] sm:$0xf]
    %v25 = vld [vmem:[%s0 + $0x30] sm:$0xf]
    %v26 = vld [vmem:[%s0 + $0x34] sm:$0xf]
    %v27 = vld [vmem:[%s0 + $0x38] sm:$0xf]
    %v28 = vld [vmem:[%s0 + $0x3c] sm:$0xf]
    %v29 = vld [vmem:[%s1] sm:$0xf]
    %v46 = vunpack.c.l.b16 %v13
    %v47 = vunpack.c.l.b16 %v14
    %v48 = vunpack.c.l.b16 %v15
    %v49 = vunpack.c.l.b16 %v16
    %v50 = vunpack.c.l.b16 %v17
    %v51 = vunpack.c.l.b16 %v18
    %v52 = vunpack.c.l.b16 %v19
    %v53 = vunpack.c.l.b16 %v20
    %v54 = vunpack.c.l.b16 %v21
    %v55 = vunpack.c.l.b16 %v22
    %v56 = vunpack.c.l.b16 %v23
    %v57 = vunpack.c.l.b16 %v24
    %v58 = vunpack.c.l.b16 %v25
    %v59 = vunpack.c.l.b16 %v26
    %v60 = vunpack.c.l.b16 %v27
    %v61 = vunpack.c.l.b16 %v28
    %v62 = vpack.c.b16 %v47, %v46
    %v63 = vpack.c.b16 %v49, %v48
    %v64 = vpack.c.b16 %v51, %v50
    %v65 = vpack.c.b16 %v53, %v52
    %v66 = vpack.c.b16 %v55, %v54
    %v67 = vpack.c.b16 %v57, %v56
    %v68 = vpack.c.b16 %v59, %v58
    %v69 = vpack.c.b16 %v61, %v60
    %vm70 = vcmask 64512
    %v72 = vsel %vm70, %v62, 0
    %v75 = vsel %vm70, %v63, 0
    %v78 = vsel %vm70, %v64, 0
    %v81 = vsel %vm70, %v65, 0
    %v84 = vsel %vm70, %v66, 0
    %v87 = vsel %vm70, %v67, 0
    %v90 = vsel %vm70, %v68, 0
    %v93 = vsel %vm70, %v69, 0
    %vm95 = vcmask 1043456
    %v97 = vsel %vm95, %v29, 0
    %99 = vmatpush.bf16.msra.mxu0 0
    %100 = vmatpush.bf16.msra.mxu0 0
    %101 = vmatpush.bf16.msra.mxu0 0
    %102 = vmatpush.bf16.msra.mxu0 0
    %103 = vmatpush.bf16.msra.mxu0 0
    %104 = vmatpush.bf16.msra.mxu0 0
    %105 = vmatpush.bf16.msra.mxu0 0
    %106 = vmatpush.bf16.msra.mxu0 %v97
    %107 = vmatmul.bf16.gmra.mxu0 %v72
    %v108 = vpop.f32.mrf.mxu0
    %v109 = vadd.f32 0.0, %v108
    %v110 = vpop.f32.mrf.mxu0
    %v111 = vadd.f32 0.0, %v110
    %112 = vmatmul.bf16.gmra.mxu0 %v75
    %v113 = vpop.f32.mrf.mxu0
    %v114 = vadd.f32 0.0, %v113
    %v115 = vpop.f32.mrf.mxu0
    %v116 = vadd.f32 0.0, %v115
    %117 = vmatmul.bf16.gmra.mxu0 %v78
    %v118 = vpop.f32.mrf.mxu0
    %v119 = vadd.f32 0.0, %v118
    %v120 = vpop.f32.mrf.mxu0
    %v121 = vadd.f32 0.0, %v120
    %122 = vmatmul.bf16.gmra.mxu0 %v81
    %v123 = vpop.f32.mrf.mxu0
    %v124 = vadd.f32 0.0, %v123
    %v125 = vpop.f32.mrf.mxu0
    %v126 = vadd.f32 0.0, %v125
    %127 = vmatmul.bf16.gmra.mxu0 %v84
    %v128 = vpop.f32.mrf.mxu0
    %v129 = vadd.f32 0.0, %v128
    %v130 = vpop.f32.mrf.mxu0
    %v131 = vadd.f32 0.0, %v130
    %132 = vmatmul.bf16.gmra.mxu0 %v87
    %v133 = vpop.f32.mrf.mxu0
    %v134 = vadd.f32 0.0, %v133
    %v135 = vpop.f32.mrf.mxu0
    %v136 = vadd.f32 0.0, %v135
    %137 = vmatmul.bf16.gmra.mxu0 %v90
    %v138 = vpop.f32.mrf.mxu0
    %v139 = vadd.f32 0.0, %v138
    %v140 = vpop.f32.mrf.mxu0
    %v141 = vadd.f32 0.0, %v140
    %142 = vmatmul.bf16.gmra.mxu0 %v93
    %v143 = vpop.f32.mrf.mxu0
    %v144 = vadd.f32 0.0, %v143
    %v145 = vpop.f32.mrf.mxu0
    %v146 = vadd.f32 0.0, %v145
    %147 = vdwg.mxu0
    %v148 = vpack.c.bf16 %v109, %v109
    %v149 = vpack.c.bf16 %v111, %v111
    %v150 = vpack.c.bf16 %v114, %v114
    %v151 = vpack.c.bf16 %v116, %v116
    %v152 = vpack.c.bf16 %v119, %v119
    %v153 = vpack.c.bf16 %v121, %v121
    %v154 = vpack.c.bf16 %v124, %v124
    %v155 = vpack.c.bf16 %v126, %v126
    %v156 = vpack.c.bf16 %v129, %v129
    %v157 = vpack.c.bf16 %v131, %v131
    %v158 = vpack.c.bf16 %v134, %v134
    %v159 = vpack.c.bf16 %v136, %v136
    %v160 = vpack.c.bf16 %v139, %v139
    %v161 = vpack.c.bf16 %v141, %v141
    %v162 = vpack.c.bf16 %v144, %v144
    %v163 = vpack.c.bf16 %v146, %v146
    %164 = vst [vmem:[#allocation2] sm:$0xf] %v148
    %165 = vst [vmem:[#allocation2 + $0x4] sm:$0xf] %v149
    %166 = vst [vmem:[#allocation2 + $0x8] sm:$0xf] %v150
    %167 = vst [vmem:[#allocation2 + $0xc] sm:$0xf] %v151
    %168 = vst [vmem:[#allocation2 + $0x10] sm:$0xf] %v152
    %169 = vst [vmem:[#allocation2 + $0x14] sm:$0xf] %v153
    %170 = vst [vmem:[#allocation2 + $0x18] sm:$0xf] %v154
    %171 = vst [vmem:[#allocation2 + $0x1c] sm:$0xf] %v155
    %172 = vst [vmem:[#allocation2 + $0x20] sm:$0xf] %v156
    %173 = vst [vmem:[#allocation2 + $0x24] sm:$0xf] %v157
    %174 = vst [vmem:[#allocation2 + $0x28] sm:$0xf] %v158
    %175 = vst [vmem:[#allocation2 + $0x2c] sm:$0xf] %v159
    %176 = vst [vmem:[#allocation2 + $0x30] sm:$0xf] %v160
    %177 = vst [vmem:[#allocation2 + $0x34] sm:$0xf] %v161
    %178 = vst [vmem:[#allocation2 + $0x38] sm:$0xf] %v162
    %179 = vst [vmem:[#allocation2 + $0x3c] sm:$0xf] %v163
    // Predicated region
    $region10: #{tpu_custom_call.1} parent=1 // pred_check
      _
    $region11: #{tpu_custom_call.1} parent=1 // pred_check_branch
      %181 = sbr.rel (0) target = $region13
    $region12: #{tpu_custom_call.1} parent=1 // pred_region
      %183 = vsyncadd [#allocation3], 0
      %s184 = sshll.u32 [#allocation2], 4
      %s185 = int_to_ptr.vmem [resolvable:$true] %s184
      %s186 = sshll.u32 %s2, 4
      %s187 = int_to_ptr.hbm [resolvable:$true] %s186
      %192 = dma.vmem_to_hbm [thread:$0]  %s185, 1024, %s187, [#allocation3], 64, 64, 4
    $region13: #{tpu_custom_call.1} parent=1 // pred_fallthru
      _
    // Predicated region
    $region14: #{tpu_custom_call.1} parent=1 // pred_check
      _
    $region15: #{tpu_custom_call.1} parent=1 // pred_check_branch
      %194 = sbr.rel (0) target = $region17
    $region16: #{tpu_custom_call.1} parent=1 // pred_region
      %196 = dma.done [#allocation3], 1024
    $region17: #{tpu_custom_call.1} parent=1 // pred_fallthru
      _
    %197 = vsyncpa [#allocation3], 1

</llo_original>
